<compile_context>
chip_gen: v6e
topology: v6e:2x2x1
jax: 0.10.0
libtpu: 0.0.40
codegen_flags: <defaults>
</compile_context>

<pallas_src>
import jax
import jax.numpy as jnp
from jax.experimental import pallas as pl
from jax.experimental.pallas import tpu as pltpu


# ------------------------------ Pallas kernel ------------------------------- #

def fused_head_kernel(x_ref, wf_ref, scale_ref, shift_ref, wl_ref, bias_ref,
                      o_ref):
    """Fused conv-as-matmul + ELU + BN(eval) + Flatten + Linear.

    x_ref:     (TB, C*D, T)  bf16  activations, native layout, k = c*D + d
    wf_ref:    (D, C*D)      bf16  conv weight, wf[o, c*D+d] = W[o, d, c]
    scale_ref: (D, 1)        f32   gamma / sqrt(var + eps)
    shift_ref: (D, 1)        f32   beta - mean * scale
    wl_ref:    (N, D, T)     bf16  linear weight, wl[n, o, t] = lin_w[n, o*T+t]
    bias_ref:  (1, N)        f32
    o_ref:     (TB, 1, N)    f32   logits
    """
    TB = x_ref.shape[0]

    # Weights loaded / upcast once per grid step (hoisted out of the batch loop).
    wf = wf_ref[...]                                   # (D, C*D) bf16
    scale = scale_ref[...]                             # (D, 1)   f32
    shift = shift_ref[...]                             # (D, 1)   f32
    wl = wl_ref[...].astype(jnp.float32)               # (N, D, T) f32
    bias = bias_ref[...]                               # (1, N)   f32

    for bb in range(TB):                               # small static unroll (<=8)
        xb = x_ref[bb]                                 # (C*D, T) bf16

        # Conv2d(D, D, kernel=(C,1), bias=False) == one MXU matmul, f32 acc.
        y = jnp.dot(wf, xb, preferred_element_type=jnp.float32)   # (D, T) f32

        # ELU (alpha = 1): exp on the clamped value (no inf from the dead branch,
        # error near 0 is far below tolerance).
        y = jnp.where(y > 0.0, y, jnp.exp(jnp.minimum(y, 0.0)) - 1.0)

        # BatchNorm2d (eval) folded to a per-channel affine; (D, 1) columns
        # broadcast across the T lanes of the (D, T) tile.
        y = y * scale + shift
        # TODO(synk): Dropout2d is identity at inference; no stochastic mask emitted.

        # Linear over the NCHW flatten order (o*T + t):
        #   logits[n] = bias[n] + sum_{d,t} y[d, t] * wl[n, d, t]
        # N is tiny, so do it on the VPU/XLU: broadcast-multiply + two lane
        # reductions.  No activation reshape/transpose, no micro-matmuls.
        prod = wl * y[None, :, :]                      # (N, D, T) f32
        s = jnp.sum(prod, axis=2)                      # (N, D)
        s = jnp.sum(s, axis=1)                         # (N,)
        logits = s[None, :] + bias                     # (1, N)

        o_ref[bb] = logits.astype(o_ref.dtype)


# -------------------------------- Wrapper ------------------------------------ #

def classifier_head_bcic(x, conv_w, bn_gamma, bn_beta, bn_mean, bn_var,
                         lin_w, lin_b, eps=1e-5, batch_block=None):
    """x: (B, C, D, T) float32 — same layout the PyTorch module receives."""
    B, C, D, T = x.shape
    N = lin_w.shape[0]

    # Batches per grid step (small static in-kernel unroll; amortizes the
    # ~0.35us per-step overhead at realistic B).
    if batch_block is None:
        batch_block = next(d for d in (8, 4, 2, 1) if B % d == 0)
    tb = batch_block
    assert B % tb == 0
    nb = B // tb

    # --- trace-time prep (tiny weight permutes; x gets a FREE reshape only) ---
    # Activations: pure reshape of the native (B, C, D, T) buffer + bf16 cast.
    # No transpose -> no extra HBM read+write pass over the activation.
    xr = x.reshape(B, C * D, T).astype(jnp.bfloat16)

    # Conv weight (D_out, D_in, C, 1) -> wf[o, c*D + d] = W[o, d, c].
    wf = jnp.transpose(conv_w[..., 0], (0, 2, 1)).reshape(D, C * D)
    wf = wf.astype(jnp.bfloat16)

    # BatchNorm (eval) folded to per-channel affine, kept f32.
    inv_std = 1.0 / jnp.sqrt(bn_var + eps)
    scale = (bn_gamma * inv_std).reshape(D, 1).astype(jnp.float32)
    shift = (bn_beta - bn_mean * bn_gamma * inv_std).reshape(D, 1)
    shift = shift.astype(jnp.float32)

    # Linear weight (N, D*T) -> (N, D, T): free reshape (flatten order o*T + t).
    wl = lin_w.reshape(N, D, T).astype(jnp.bfloat16)
    bias = lin_b.reshape(1, N).astype(jnp.float32)

    out = pl.pallas_call(
        fused_head_kernel,
        out_shape=jax.ShapeDtypeStruct((B, 1, N), jnp.float32),
        grid=(nb,),
        in_specs=[
            pl.BlockSpec((tb, C * D, T), lambda i: (i, 0, 0)),   # per-batch slab
            pl.BlockSpec((D, C * D), lambda i: (0, 0)),          # VMEM-resident
            pl.BlockSpec((D, 1), lambda i: (0, 0)),
            pl.BlockSpec((D, 1), lambda i: (0, 0)),
            pl.BlockSpec((N, D, T), lambda i: (0, 0, 0)),
            pl.BlockSpec((1, N), lambda i: (0, 0)),
        ],
        out_specs=pl.BlockSpec((tb, 1, N), lambda i: (i, 0, 0)),
        compiler_params=pltpu.CompilerParams(
            dimension_semantics=("parallel",),        # v7x: 2 TCs split batches
            vmem_limit_bytes=32 * 1024 * 1024,        # safe on v5e/v6e/v7x
        ),
    )(xr, wf, scale, shift, wl, bias)

    return out.reshape(B, N)


# ---------------------------- Pure-JAX reference ------------------------------ #

def classifier_head_ref(x, conv_w, bn_gamma, bn_beta, bn_mean, bn_var,
                        lin_w, lin_b, eps=1e-5):
    B, C, D, T = x.shape
    # conv: y[b,o,t] = sum_{d,c} W[o,d,c] * x[b,c,d,t]
    y = jnp.einsum('bcdt,odc->bot', x, conv_w[..., 0])
    y = jnp.where(y > 0, y, jnp.exp(jnp.minimum(y, 0.0)) - 1.0)
    inv_std = 1.0 / jnp.sqrt(bn_var + eps)
    y = (y - bn_mean[None, :, None]) * (inv_std * bn_gamma)[None, :, None] \
        + bn_beta[None, :, None]
    y = y.reshape(B, D * T)
    return y @ lin_w.T + lin_b[None, :]


# ----------------------------------- Main ------------------------------------- #

if __name__ == "__main__":
    B, C, D, T, N = 2, 4, 32, 16, 4   # batch, num_channels, embed_dim, seq_len, classes

    key = jax.random.PRNGKey(0)
    ks = jax.random.split(key, 8)
    x = jax.random.normal(ks[0], (B, C, D, T), dtype=jnp.float32)

    conv_w = jax.random.normal(ks[1], (D, D, C, 1), dtype=jnp.float32) * 0.05
    bn_gamma = 1.0 + 0.1 * jax.random.normal(ks[2], (D,), dtype=jnp.float32)
    bn_beta = 0.1 * jax.random.normal(ks[3], (D,), dtype=jnp.float32)
    bn_mean = 0.05 * jax.random.normal(ks[4], (D,), dtype=jnp.float32)
    bn_var = 0.5 + jax.random.uniform(ks[5], (D,), dtype=jnp.float32)
    lin_w = jax.random.normal(ks[6], (N, D * T), dtype=jnp.float32) * 0.02
    lin_b = 0.01 * jax.random.normal(ks[7], (N,), dtype=jnp.float32)

    out = classifier_head_bcic(x, conv_w, bn_gamma, bn_beta, bn_mean, bn_var,
                               lin_w, lin_b)
    out = jax.block_until_ready(out)

    ref = classifier_head_ref(x, conv_w, bn_gamma, bn_beta, bn_mean, bn_var,
                              lin_w, lin_b)
    assert out.shape == (B, N)
    # bf16 MXU operands (f32 accumulation) -> loosened tolerance; a wrong
    # permutation / BN fold would still miss by O(logit scale) >> 3e-2.
    assert jnp.allclose(out, ref, rtol=3e-2, atol=3e-2), (
        f"mismatch vs reference, max abs diff = {jnp.max(jnp.abs(out - ref))}")

    print("KERNEL_OK")
</pallas_src>

<mosaic_0001>
module attributes {stable_mosaic.version = 11 : i64} {
  func.func @fused_head_kernel(%arg0: i32, %arg1: memref<2x128x16xbf16, #tpu.memory_space<vmem>>, %arg2: memref<32x128xbf16, #tpu.memory_space<vmem>>, %arg3: memref<32x1xf32, #tpu.memory_space<vmem>>, %arg4: memref<32x1xf32, #tpu.memory_space<vmem>>, %arg5: memref<4x32x16xbf16, #tpu.memory_space<vmem>>, %arg6: memref<1x4xf32, #tpu.memory_space<vmem>>, %arg7: memref<2x1x4xf32, #tpu.memory_space<vmem>>) attributes {dimension_semantics = [#tpu.dimension_semantics<parallel>], iteration_bounds = array<i64: 1>, scalar_prefetch = 0 : i64, scratch_operands = 0 : i64, tpu.core_type = #tpu.core_type<tc>, window_params = [{transform_indices = @transform_0, window_bounds = array<i64: 2, 128, 16>}, {pipeline_mode = #tpu.pipeline_mode<synchronous>, transform_indices = @transform_1, window_bounds = array<i64: 32, 128>}, {pipeline_mode = #tpu.pipeline_mode<synchronous>, transform_indices = @transform_2, window_bounds = array<i64: 32, 1>}, {pipeline_mode = #tpu.pipeline_mode<synchronous>, transform_indices = @transform_3, window_bounds = array<i64: 32, 1>}, {pipeline_mode = #tpu.pipeline_mode<synchronous>, transform_indices = @transform_4, window_bounds = array<i64: 4, 32, 16>}, {pipeline_mode = #tpu.pipeline_mode<synchronous>, transform_indices = @transform_5, window_bounds = array<i64: 1, 4>}, {transform_indices = @transform_6, window_bounds = array<i64: 2, 1, 4>}]} {
    %c0 = arith.constant 0 : index
    %c0_0 = arith.constant 0 : index
    %0 = vector.load %arg2[%c0, %c0_0] : memref<32x128xbf16, #tpu.memory_space<vmem>>, vector<32x128xbf16>
    %c0_1 = arith.constant 0 : index
    %c0_2 = arith.constant 0 : index
    %1 = vector.load %arg3[%c0_1, %c0_2] : memref<32x1xf32, #tpu.memory_space<vmem>>, vector<32x1xf32>
    %c0_3 = arith.constant 0 : index
    %c0_4 = arith.constant 0 : index
    %2 = vector.load %arg4[%c0_3, %c0_4] : memref<32x1xf32, #tpu.memory_space<vmem>>, vector<32x1xf32>
    %c0_5 = arith.constant 0 : index
    %c0_6 = arith.constant 0 : index
    %c0_7 = arith.constant 0 : index
    %3 = vector.load %arg5[%c0_5, %c0_6, %c0_7] : memref<4x32x16xbf16, #tpu.memory_space<vmem>>, vector<4x32x16xbf16>
    %4 = arith.extf %3 : vector<4x32x16xbf16> to vector<4x32x16xf32>
    %c0_8 = arith.constant 0 : index
    %c0_9 = arith.constant 0 : index
    %5 = vector.load %arg6[%c0_8, %c0_9] : memref<1x4xf32, #tpu.memory_space<vmem>>, vector<1x4xf32>
    %c0_10 = arith.constant 0 : index
    %c0_11 = arith.constant 0 : index
    %c0_12 = arith.constant 0 : index
    %6 = vector.load %arg1[%c0_10, %c0_11, %c0_12] : memref<2x128x16xbf16, #tpu.memory_space<vmem>>, vector<1x128x16xbf16>
    %7 = vector.shape_cast %6 : vector<1x128x16xbf16> to vector<128x16xbf16>
    %cst = arith.constant dense<0.000000e+00> : vector<32x16xf32>
    %8 = tpu.matmul %0, %7, %cst {dimension_numbers = #tpu.dot_dimension_numbers<[1], [0], [0], [1], [0, 0, 1, 1], [], []>} : vector<32x128xbf16>, vector<128x16xbf16>, vector<32x16xf32> -> vector<32x16xf32>
    %cst_13 = arith.constant 0.000000e+00 : f32
    %9 = vector.broadcast %cst_13 : f32 to vector<32x16xf32>
    %10 = arith.cmpf ogt, %8, %9 : vector<32x16xf32>
    %cst_14 = arith.constant 0.000000e+00 : f32
    %11 = vector.broadcast %cst_14 : f32 to vector<32x16xf32>
    %12 = arith.minimumf %8, %11 : vector<32x16xf32>
    %13 = math.exp %12 : vector<32x16xf32>
    %cst_15 = arith.constant 1.000000e+00 : f32
    %14 = vector.broadcast %cst_15 : f32 to vector<32x16xf32>
    %15 = arith.subf %13, %14 : vector<32x16xf32>
    %16 = arith.select %10, %8, %15 : vector<32x16xi1>, vector<32x16xf32>
    %17 = vector.broadcast %1 : vector<32x1xf32> to vector<32x16xf32>
    %18 = arith.mulf %16, %17 : vector<32x16xf32>
    %19 = vector.broadcast %2 : vector<32x1xf32> to vector<32x16xf32>
    %20 = arith.addf %18, %19 : vector<32x16xf32>
    %21 = vector.shape_cast %20 : vector<32x16xf32> to vector<1x32x16xf32>
    %22 = vector.broadcast %21 : vector<1x32x16xf32> to vector<4x32x16xf32>
    %23 = arith.mulf %4, %22 : vector<4x32x16xf32>
    %cst_16 = arith.constant dense<0.000000e+00> : vector<4x32xf32>
    %24 = vector.multi_reduction <add>, %23, %cst_16 [2] : vector<4x32x16xf32> to vector<4x32xf32>
    %cst_17 = arith.constant dense<0.000000e+00> : vector<4xf32>
    %25 = vector.multi_reduction <add>, %24, %cst_17 [1] : vector<4x32xf32> to vector<4xf32>
    %26 = vector.shape_cast %25 : vector<4xf32> to vector<1x4xf32>
    %27 = arith.addf %26, %5 : vector<1x4xf32>
    %c0_18 = arith.constant 0 : index
    %c0_19 = arith.constant 0 : index
    %c0_20 = arith.constant 0 : index
    %28 = vector.load %arg7[%c0_18, %c0_19, %c0_20] : memref<2x1x4xf32, #tpu.memory_space<vmem>>, vector<1x1x4xf32>
    %29 = vector.shape_cast %28 : vector<1x1x4xf32> to vector<1x4xf32>
    %30 = vector.shape_cast %27 : vector<1x4xf32> to vector<1x1x4xf32>
    tpu.vector_store %arg7[%c0_18, %c0_19, %c0_20], %30 {strides = array<i32>} : memref<2x1x4xf32, #tpu.memory_space<vmem>>, vector<1x1x4xf32>,
    %c1 = arith.constant 1 : index
    %c0_21 = arith.constant 0 : index
    %c0_22 = arith.constant 0 : index
    %31 = vector.load %arg1[%c1, %c0_21, %c0_22] : memref<2x128x16xbf16, #tpu.memory_space<vmem>>, vector<1x128x16xbf16>
    %32 = vector.shape_cast %31 : vector<1x128x16xbf16> to vector<128x16xbf16>
    %cst_23 = arith.constant dense<0.000000e+00> : vector<32x16xf32>
    %33 = tpu.matmul %0, %32, %cst_23 {dimension_numbers = #tpu.dot_dimension_numbers<[1], [0], [0], [1], [0, 0, 1, 1], [], []>} : vector<32x128xbf16>, vector<128x16xbf16>, vector<32x16xf32> -> vector<32x16xf32>
    %cst_24 = arith.constant 0.000000e+00 : f32
    %34 = vector.broadcast %cst_24 : f32 to vector<32x16xf32>
    %35 = arith.cmpf ogt, %33, %34 : vector<32x16xf32>
    %cst_25 = arith.constant 0.000000e+00 : f32
    %36 = vector.broadcast %cst_25 : f32 to vector<32x16xf32>
    %37 = arith.minimumf %33, %36 : vector<32x16xf32>
    %38 = math.exp %37 : vector<32x16xf32>
    %cst_26 = arith.constant 1.000000e+00 : f32
    %39 = vector.broadcast %cst_26 : f32 to vector<32x16xf32>
    %40 = arith.subf %38, %39 : vector<32x16xf32>
    %41 = arith.select %35, %33, %40 : vector<32x16xi1>, vector<32x16xf32>
    %42 = vector.broadcast %1 : vector<32x1xf32> to vector<32x16xf32>
    %43 = arith.mulf %41, %42 : vector<32x16xf32>
    %44 = vector.broadcast %2 : vector<32x1xf32> to vector<32x16xf32>
    %45 = arith.addf %43, %44 : vector<32x16xf32>
    %46 = vector.shape_cast %45 : vector<32x16xf32> to vector<1x32x16xf32>
    %47 = vector.broadcast %46 : vector<1x32x16xf32> to vector<4x32x16xf32>
    %48 = arith.mulf %4, %47 : vector<4x32x16xf32>
    %cst_27 = arith.constant dense<0.000000e+00> : vector<4x32xf32>
    %49 = vector.multi_reduction <add>, %48, %cst_27 [2] : vector<4x32x16xf32> to vector<4x32xf32>
    %cst_28 = arith.constant dense<0.000000e+00> : vector<4xf32>
    %50 = vector.multi_reduction <add>, %49, %cst_28 [1] : vector<4x32xf32> to vector<4xf32>
    %51 = vector.shape_cast %50 : vector<4xf32> to vector<1x4xf32>
    %52 = arith.addf %51, %5 : vector<1x4xf32>
    %c1_29 = arith.constant 1 : index
    %c0_30 = arith.constant 0 : index
    %c0_31 = arith.constant 0 : index
    %53 = vector.load %arg7[%c1_29, %c0_30, %c0_31] : memref<2x1x4xf32, #tpu.memory_space<vmem>>, vector<1x1x4xf32>
    %54 = vector.shape_cast %53 : vector<1x1x4xf32> to vector<1x4xf32>
    %55 = vector.shape_cast %52 : vector<1x4xf32> to vector<1x1x4xf32>
    tpu.vector_store %arg7[%c1_29, %c0_30, %c0_31], %55 {strides = array<i32>} : memref<2x1x4xf32, #tpu.memory_space<vmem>>, vector<1x1x4xf32>,
    return
  }
  func.func @transform_0(%arg0: i32) -> (i32, i32, i32) {
    %c0_i32 = arith.constant 0 : i32
    %c0_i32_0 = arith.constant 0 : i32
    %c0_i32_1 = arith.constant 0 : i32
    return %arg0, %c0_i32, %c0_i32_0 : i32, i32, i32
  }
  func.func @transform_1(%arg0: i32) -> (i32, i32) {
    %c0_i32 = arith.constant 0 : i32
    %c0_i32_0 = arith.constant 0 : i32
    %c0_i32_1 = arith.constant 0 : i32
    return %c0_i32, %c0_i32_0 : i32, i32
  }
  func.func @transform_2(%arg0: i32) -> (i32, i32) {
    %c0_i32 = arith.constant 0 : i32
    %c0_i32_0 = arith.constant 0 : i32
    %c0_i32_1 = arith.constant 0 : i32
    return %c0_i32, %c0_i32_0 : i32, i32
  }
  func.func @transform_3(%arg0: i32) -> (i32, i32) {
    %c0_i32 = arith.constant 0 : i32
    %c0_i32_0 = arith.constant 0 : i32
    %c0_i32_1 = arith.constant 0 : i32
    return %c0_i32, %c0_i32_0 : i32, i32
  }
  func.func @transform_4(%arg0: i32) -> (i32, i32, i32) {
    %c0_i32 = arith.constant 0 : i32
    %c0_i32_0 = arith.constant 0 : i32
    %c0_i32_1 = arith.constant 0 : i32
    %c0_i32_2 = arith.constant 0 : i32
    return %c0_i32, %c0_i32_0, %c0_i32_1 : i32, i32, i32
  }
  func.func @transform_5(%arg0: i32) -> (i32, i32) {
    %c0_i32 = arith.constant 0 : i32
    %c0_i32_0 = arith.constant 0 : i32
    %c0_i32_1 = arith.constant 0 : i32
    return %c0_i32, %c0_i32_0 : i32, i32
  }
  func.func @transform_6(%arg0: i32) -> (i32, i32, i32) {
    %c0_i32 = arith.constant 0 : i32
    %c0_i32_0 = arith.constant 0 : i32
    %c0_i32_1 = arith.constant 0 : i32
    return %arg0, %c0_i32, %c0_i32_0 : i32, i32, i32
  }
}

</mosaic_0001>

<llo_original>
// kernel: tpu_custom_call.1
$region0: #{tpu_custom_call.1}
  #allocation0 [shape = 'u32[]', space=smem, size = 0x4, offset = 0x4, fixed_abs, tag = 'smem constant byte address 0x4 - core index']
  #allocation1 [shape = 'u32[144,128]{1,0:T(1,128)}', space=vmem, size = 0x12000, scoped, tag = 'internal scratch']
  %s0 = inlined_call_operand.vmem [shape: bf16[2,128,16], index: 0, kind: input, shape index: {}]
  %s1 = inlined_call_operand.vmem [shape: bf16[32,128], index: 1, kind: input, shape index: {}]
  %s2 = inlined_call_operand.vmem [shape: f32[32,1], index: 2, kind: input, shape index: {}]
  %s3 = inlined_call_operand.vmem [shape: f32[32,1], index: 3, kind: input, shape index: {}]
  %s4 = inlined_call_operand.vmem [shape: bf16[4,32,16], index: 4, kind: input, shape index: {}]
  %s5 = inlined_call_operand.vmem [shape: f32[1,4], index: 5, kind: input, shape index: {}]
  %s6 = inlined_call_operand.hbm [shape: f32[2,1,4], index: 6, kind: output, shape index: {}]
  %s7 = sld [smem:[#allocation0]]
  $region34: #{tpu_custom_call.1} parent=0
    _
  %s9 = ssub.s32 1, %s7
  %s10 = scalar_select 0, %s9, %s7
  $region1: #{tpu_custom_call.1} parent=0
    #allocation2 [shape = 'u8[1024]{0}', space=vmem, size = 0x400, scoped, tag = 'output window, operand 0, single buffered']
    #allocation3 [shape = 's32[1]{0}', space=sflag, size = 0x4, scoped, tag = 'scoped memory for tpu_custom_call.1']
    %11 = vsyncpa [#allocation3], 0
    // Predicated region
    $region2: #{tpu_custom_call.1} parent=1 // pred_check
      _
    $region3: #{tpu_custom_call.1} parent=1 // pred_check_branch
      %13 = sbr.rel (0) target = $region5
    $region4: #{tpu_custom_call.1} parent=1 // pred_region
      _
    $region5: #{tpu_custom_call.1} parent=1 // pred_fallthru
      _
    // Predicated region
    $region6: #{tpu_custom_call.1} parent=1 // pred_check
      _
    $region7: #{tpu_custom_call.1} parent=1 // pred_check_branch
      %15 = sbr.rel (0) target = $region9
    $region8: #{tpu_custom_call.1} parent=1 // pred_region
      _
    $region9: #{tpu_custom_call.1} parent=1 // pred_fallthru
      _
    // Predicated region
    $region10: #{tpu_custom_call.1} parent=1 // pred_check
      _
    $region11: #{tpu_custom_call.1} parent=1 // pred_check_branch
      %17 = sbr.rel (0) target = $region13
    $region12: #{tpu_custom_call.1} parent=1 // pred_region
      _
    $region13: #{tpu_custom_call.1} parent=1 // pred_fallthru
      _
    // Predicated region
    $region14: #{tpu_custom_call.1} parent=1 // pred_check
      _
    $region15: #{tpu_custom_call.1} parent=1 // pred_check_branch
      %19 = sbr.rel (0) target = $region17
    $region16: #{tpu_custom_call.1} parent=1 // pred_region
      _
    $region17: #{tpu_custom_call.1} parent=1 // pred_fallthru
      _
    // Predicated region
    $region18: #{tpu_custom_call.1} parent=1 // pred_check
      _
    $region19: #{tpu_custom_call.1} parent=1 // pred_check_branch
      %21 = sbr.rel (0) target = $region21
    $region20: #{tpu_custom_call.1} parent=1 // pred_region
      _
    $region21: #{tpu_custom_call.1} parent=1 // pred_fallthru
      _
    // Predicated region
    $region22: #{tpu_custom_call.1} parent=1 // pred_check
      _
    $region23: #{tpu_custom_call.1} parent=1 // pred_check_branch
      %23 = sbr.rel (0) target = $region25
    $region24: #{tpu_custom_call.1} parent=1 // pred_region
      _
    $region25: #{tpu_custom_call.1} parent=1 // pred_fallthru
      _
    %v25 = vld [vmem:[%s1] sm:$0xf]
    %v26 = vld [vmem:[%s1 + $0x4] sm:$0xf]
    %v27 = vld [vmem:[%s1 + $0x8] sm:$0xf]
    %v28 = vld [vmem:[%s1 + $0xc] sm:$0xf]
    %v29 = vld [vmem:[%s2] sm:$0xff]
    %v30 = vld [vmem:[%s2 + $0x8] sm:$0xff]
    %v31 = vld [vmem:[%s2 + $0x10] sm:$0xff]
    %v32 = vld [vmem:[%s2 + $0x18] sm:$0xff]
    %v33 = vld [vmem:[%s3] sm:$0xff]
    %v34 = vld [vmem:[%s3 + $0x8] sm:$0xff]
    %v35 = vld [vmem:[%s3 + $0x10] sm:$0xff]
    %v36 = vld [vmem:[%s3 + $0x18] sm:$0xff]
    %v37 = vld [vmem:[%s4] sm:$0xf]
    %v38 = vld [vmem:[%s4 + $0x4] sm:$0xf]
    %v39 = vld [vmem:[%s4 + $0x8] sm:$0xf]
    %v40 = vld [vmem:[%s4 + $0xc] sm:$0xf]
    %v41 = vld [vmem:[%s4 + $0x10] sm:$0xf]
    %v42 = vld [vmem:[%s4 + $0x14] sm:$0xf]
    %v43 = vld [vmem:[%s4 + $0x18] sm:$0xf]
    %v44 = vld [vmem:[%s4 + $0x1c] sm:$0xf]
    %v45 = vld [vmem:[%s4 + $0x20] sm:$0xf]
    %v46 = vld [vmem:[%s4 + $0x24] sm:$0xf]
    %v47 = vld [vmem:[%s4 + $0x28] sm:$0xf]
    %v48 = vld [vmem:[%s4 + $0x2c] sm:$0xf]
    %v49 = vld [vmem:[%s4 + $0x30] sm:$0xf]
    %v50 = vld [vmem:[%s4 + $0x34] sm:$0xf]
    %v51 = vld [vmem:[%s4 + $0x38] sm:$0xf]
    %v52 = vld [vmem:[%s4 + $0x3c] sm:$0xf]
    %v53 = vunpack.c.l.bf16 %v37
    %v54 = vunpack.c.l.bf16 %v38
    %v55 = vunpack.c.l.bf16 %v39
    %v56 = vunpack.c.l.bf16 %v40
    %v57 = vunpack.c.l.bf16 %v41
    %v58 = vunpack.c.l.bf16 %v42
    %v59 = vunpack.c.l.bf16 %v43
    %v60 = vunpack.c.l.bf16 %v44
    %v61 = vunpack.c.l.bf16 %v45
    %v62 = vunpack.c.l.bf16 %v46
    %v63 = vunpack.c.l.bf16 %v47
    %v64 = vunpack.c.l.bf16 %v48
    %v65 = vunpack.c.l.bf16 %v49
    %v66 = vunpack.c.l.bf16 %v50
    %v67 = vunpack.c.l.bf16 %v51
    %v68 = vunpack.c.l.bf16 %v52
    %v69 = vld [vmem:[%s5] sm:$0x1]
    %v70 = vld [vmem:[%s0] sm:$0xf]
    %v71 = vld [vmem:[%s0 + $0x4] sm:$0xf]
    %v72 = vld [vmem:[%s0 + $0x8] sm:$0xf]
    %v73 = vld [vmem:[%s0 + $0xc] sm:$0xf]
    %v74 = vld [vmem:[%s0 + $0x10] sm:$0xf]
    %v75 = vld [vmem:[%s0 + $0x14] sm:$0xf]
    %v76 = vld [vmem:[%s0 + $0x18] sm:$0xf]
    %v77 = vld [vmem:[%s0 + $0x1c] sm:$0xf]
    %v78 = vld [vmem:[%s0 + $0x20] sm:$0xf]
    %v79 = vld [vmem:[%s0 + $0x24] sm:$0xf]
    %v80 = vld [vmem:[%s0 + $0x28] sm:$0xf]
    %v81 = vld [vmem:[%s0 + $0x2c] sm:$0xf]
    %v82 = vld [vmem:[%s0 + $0x30] sm:$0xf]
    %v83 = vld [vmem:[%s0 + $0x34] sm:$0xf]
    %v84 = vld [vmem:[%s0 + $0x38] sm:$0xf]
    %v85 = vld [vmem:[%s0 + $0x3c] sm:$0xf]
    %v90 = vunpack.c.l.b16 %v25
    %v91 = vunpack.c.l.b16 %v26
    %v92 = vunpack.c.l.b16 %v27
    %v93 = vunpack.c.l.b16 %v28
    %v94 = vpack.c.b16 %v91, %v90
    %v95 = vpack.c.b16 %v93, %v92
    %v114 = vunpack.c.l.b16 %v70
    %v115 = vunpack.c.l.b16 %v71
    %v116 = vunpack.c.l.b16 %v72
    %v117 = vunpack.c.l.b16 %v73
    %v118 = vunpack.c.l.b16 %v74
    %v119 = vunpack.c.l.b16 %v75
    %v120 = vunpack.c.l.b16 %v76
    %v121 = vunpack.c.l.b16 %v77
    %v122 = vunpack.c.l.b16 %v78
    %v123 = vunpack.c.l.b16 %v79
    %v124 = vunpack.c.l.b16 %v80
    %v125 = vunpack.c.l.b16 %v81
    %v126 = vunpack.c.l.b16 %v82
    %v127 = vunpack.c.l.b16 %v83
    %v128 = vunpack.c.l.b16 %v84
    %v129 = vunpack.c.l.b16 %v85
    %v130 = vpack.c.b16 %v115, %v114
    %v131 = vpack.c.b16 %v117, %v116
    %v132 = vpack.c.b16 %v119, %v118
    %v133 = vpack.c.b16 %v121, %v120
    %v134 = vpack.c.b16 %v123, %v122
    %v135 = vpack.c.b16 %v125, %v124
    %v136 = vpack.c.b16 %v127, %v126
    %v137 = vpack.c.b16 %v129, %v128
    %146 = vmatprep.subr.bf16.mxu0 0
    %147 = vmatpush1.bf16.msra.mxu0 %v137
    %148 = vmatprep.subr.bf16.mxu0 0
    %149 = vmatpush1.bf16.msra.mxu0 %v136
    %150 = vmatprep.subr.bf16.mxu0 0
    %151 = vmatpush1.bf16.msra.mxu0 %v135
    %152 = vmatprep.subr.bf16.mxu0 0
    %153 = vmatpush1.bf16.msra.mxu0 %v134
    %154 = vmatprep.subr.bf16.mxu0 0
    %155 = vmatpush1.bf16.msra.mxu0 %v133
    %156 = vmatprep.subr.bf16.mxu0 0
    %157 = vmatpush1.bf16.msra.mxu0 %v132
    %158 = vmatprep.subr.bf16.mxu0 0
    %159 = vmatpush1.bf16.msra.mxu0 %v131
    %160 = vmatprep.subr.bf16.mxu0 0
    %161 = vmatpush1.bf16.msra.mxu0 %v130
    %162 = vmatprep.subr.bf16.mxu0 0
    %163 = vmatpush2.bf16.msra.mxu0 0
    %164 = vmatprep.subr.bf16.mxu0 0
    %165 = vmatpush2.bf16.msra.mxu0 0
    %166 = vmatprep.subr.bf16.mxu0 0
    %167 = vmatpush2.bf16.msra.mxu0 0
    %168 = vmatprep.subr.bf16.mxu0 0
    %169 = vmatpush2.bf16.msra.mxu0 0
    %170 = vmatprep.subr.bf16.mxu0 0
    %171 = vmatpush2.bf16.msra.mxu0 0
    %172 = vmatprep.subr.bf16.mxu0 0
    %173 = vmatpush2.bf16.msra.mxu0 0
    %174 = vmatprep.subr.bf16.mxu0 0
    %175 = vmatpush2.bf16.msra.mxu0 0
    %176 = vmatprep.subr.bf16.mxu0 0
    %177 = vmatpush2.bf16.msra.mxu0 0
    %178 = vmatprep.mubr.bf16.mxu0 0
    %179 = vmatmul.mubr.bf16.gmra.mxu0 %v94
    %v180 = vpop.f32.mrf.mxu0
    %v181 = vadd.f32 0.0, %v180
    %v182 = vpop.f32.mrf.mxu0
    %v183 = vpop.f32.mrf.mxu0
    %v184 = vadd.f32 0.0, %v183
    %v185 = vpop.f32.mrf.mxu0
    %186 = vmatprep.mubr.bf16.mxu0 0
    %187 = vmatmul.mubr.bf16.gmra.mxu0 %v95
    %v188 = vpop.f32.mrf.mxu0
    %v189 = vadd.f32 0.0, %v188
    %v190 = vpop.f32.mrf.mxu0
    %v191 = vpop.f32.mrf.mxu0
    %v192 = vadd.f32 0.0, %v191
    %v193 = vpop.f32.mrf.mxu0
    %194 = vdwg.mxu0
    %vm195 = vcmp.gt.f32.partialorder %v181, 0.0
    %vm196 = vcmp.gt.f32.partialorder %v184, 0.0
    %vm197 = vcmp.gt.f32.partialorder %v189, 0.0
    %vm198 = vcmp.gt.f32.partialorder %v192, 0.0
    %v199 = vmin.f32 %v181, 0.0
    %v200 = vmin.f32 %v184, 0.0
    %v201 = vmin.f32 %v189, 0.0
    %v202 = vmin.f32 %v192, 0.0
    %v203 = vmul.f32 %v199, 1.442695
    %v204 = vpow.pop %v203
    %v205 = vmul.f32 %v200, 1.442695
    %v206 = vpow.pop %v205
    %v207 = vmul.f32 %v201, 1.442695
    %v208 = vpow.pop %v207
    %v209 = vmul.f32 %v202, 1.442695
    %v210 = vpow.pop %v209
    %v211 = vsub.f32 %v204, 1.0
    %v212 = vsub.f32 %v206, 1.0
    %v213 = vsub.f32 %v208, 1.0
    %v214 = vsub.f32 %v210, 1.0
    %v215 = vsel %vm195, %v181, %v211
    %v216 = vsel %vm196, %v184, %v212
    %v217 = vsel %vm197, %v189, %v213
    %v218 = vsel %vm198, %v192, %v214
    %220 = vset.pattern.permute.xlu0 0
    %221 = vperm.xlu0 %220, %v29
    %v222 = vpop.permute.xlu0 %221
    %225 = vset.pattern.permute.xlu0 0
    %226 = vperm.xlu0 %225, %v30
    %v227 = vpop.permute.xlu0 %226
    %230 = vset.pattern.permute.xlu0 0
    %231 = vperm.xlu0 %230, %v31
    %v232 = vpop.permute.xlu0 %231
    %235 = vset.pattern.permute.xlu0 0
    %236 = vperm.xlu0 %235, %v32
    %v237 = vpop.permute.xlu0 %236
    %v239 = vmul.f32 %v215, %v222
    %v240 = vmul.f32 %v216, %v227
    %v241 = vmul.f32 %v217, %v232
    %v242 = vmul.f32 %v218, %v237
    %244 = vset.pattern.permute.xlu0 0
    %245 = vperm.xlu0 %244, %v33
    %v246 = vpop.permute.xlu0 %245
    %249 = vset.pattern.permute.xlu0 0
    %250 = vperm.xlu0 %249, %v34
    %v251 = vpop.permute.xlu0 %250
    %254 = vset.pattern.permute.xlu0 0
    %255 = vperm.xlu0 %254, %v35
    %v256 = vpop.permute.xlu0 %255
    %259 = vset.pattern.permute.xlu0 0
    %260 = vperm.xlu0 %259, %v36
    %v261 = vpop.permute.xlu0 %260
    %v263 = vadd.f32 %v239, %v246
    %v264 = vadd.f32 %v240, %v251
    %v265 = vadd.f32 %v241, %v256
    %v266 = vadd.f32 %v242, %v261
    %v267 = vmul.f32 %v53, %v263
    %v268 = vmul.f32 %v54, %v264
    %v269 = vmul.f32 %v55, %v265
    %v270 = vmul.f32 %v56, %v266
    %v271 = vmul.f32 %v57, %v263
    %v272 = vmul.f32 %v58, %v264
    %v273 = vmul.f32 %v59, %v265
    %v274 = vmul.f32 %v60, %v266
    %v275 = vmul.f32 %v61, %v263
    %v276 = vmul.f32 %v62, %v264
    %v277 = vmul.f32 %v63, %v265
    %v278 = vmul.f32 %v64, %v266
    %v279 = vmul.f32 %v65, %v263
    %v280 = vmul.f32 %v66, %v264
    %v281 = vmul.f32 %v67, %v265
    %v282 = vmul.f32 %v68, %v266
    %vm283 = vcmask 130048
    %v284 = vsel %vm283, %v267, 0.0
    %285 = vadd.xlane.f32.xlu0 %v284
    %v286 = vpop.xlane.xlu0 %285
    %v287 = vsel %vm283, %v268, 0.0
    %288 = vadd.xlane.f32.xlu0 %v287
    %v289 = vpop.xlane.xlu0 %288
    %v290 = vsel %vm283, %v269, 0.0
    %291 = vadd.xlane.f32.xlu0 %v290
    %v292 = vpop.xlane.xlu0 %291
    %v293 = vsel %vm283, %v270, 0.0
    %294 = vadd.xlane.f32.xlu0 %v293
    %v295 = vpop.xlane.xlu0 %294
    %v296 = vsel %vm283, %v271, 0.0
    %297 = vadd.xlane.f32.xlu0 %v296
    %v298 = vpop.xlane.xlu0 %297
    %v299 = vsel %vm283, %v272, 0.0
    %300 = vadd.xlane.f32.xlu0 %v299
    %v301 = vpop.xlane.xlu0 %300
    %v302 = vsel %vm283, %v273, 0.0
    %303 = vadd.xlane.f32.xlu0 %v302
    %v304 = vpop.xlane.xlu0 %303
    %v305 = vsel %vm283, %v274, 0.0
    %306 = vadd.xlane.f32.xlu0 %v305
    %v307 = vpop.xlane.xlu0 %306
    %v308 = vsel %vm283, %v275, 0.0
    %309 = vadd.xlane.f32.xlu0 %v308
    %v310 = vpop.xlane.xlu0 %309
    %v311 = vsel %vm283, %v276, 0.0
    %312 = vadd.xlane.f32.xlu0 %v311
    %v313 = vpop.xlane.xlu0 %312
    %v314 = vsel %vm283, %v277, 0.0
    %315 = vadd.xlane.f32.xlu0 %v314
    %v316 = vpop.xlane.xlu0 %315
    %v317 = vsel %vm283, %v278, 0.0
    %318 = vadd.xlane.f32.xlu0 %v317
    %v319 = vpop.xlane.xlu0 %318
    %v320 = vsel %vm283, %v279, 0.0
    %321 = vadd.xlane.f32.xlu0 %v320
    %v322 = vpop.xlane.xlu0 %321
    %v323 = vsel %vm283, %v280, 0.0
    %324 = vadd.xlane.f32.xlu0 %v323
    %v325 = vpop.xlane.xlu0 %324
    %v326 = vsel %vm283, %v281, 0.0
    %327 = vadd.xlane.f32.xlu0 %v326
    %v328 = vpop.xlane.xlu0 %327
    %v329 = vsel %vm283, %v282, 0.0
    %330 = vadd.xlane.f32.xlu0 %v329
    %v331 = vpop.xlane.xlu0 %330
    %v348 = vlaneseq
    %v349 = vand.u32 %v348, 127
    %v350 = vlaneseq
    %v351 = vshrl.u32 %v350, 7
    %v352 = vsub.s32 %v349, %v351
    %v353 = vrot.slane %v286, %v352
    %v354 = vadd.s32 %v349, 4294967288
    %v355 = vlaneseq
    %v356 = vshrl.u32 %v355, 7
    %v357 = vsub.s32 %v354, %v356
    %v358 = vrot.slane %v289, %v357
    %vm359 = vcmask 130112
    %v360 = vsel %vm359, %v358, %v353
    %v361 = vadd.s32 %v349, 4294967280
    %v362 = vlaneseq
    %v363 = vshrl.u32 %v362, 7
    %v364 = vsub.s32 %v361, %v363
    %v365 = vrot.slane %v292, %v364
    %vm366 = vcmask 195712
    %v367 = vsel %vm366, %v365, %v360
    %v368 = vadd.s32 %v349, 4294967272
    %v369 = vlaneseq
    %v370 = vshrl.u32 %v369, 7
    %v371 = vsub.s32 %v368, %v370
    %v372 = vrot.slane %v295, %v371
    %vm373 = vcmask 261312
    %v374 = vsel %vm373, %v372, %v367
    %v375 = vlaneseq
    %v376 = vshrl.u32 %v375, 7
    %v377 = vsub.s32 %v349, %v376
    %v378 = vrot.slane %v298, %v377
    %v379 = vlaneseq
    %v380 = vshrl.u32 %v379, 7
    %v381 = vsub.s32 %v354, %v380
    %v382 = vrot.slane %v301, %v381
    %v383 = vsel %vm359, %v382, %v378
    %v384 = vlaneseq
    %v385 = vshrl.u32 %v384, 7
    %v386 = vsub.s32 %v361, %v385
    %v387 = vrot.slane %v304, %v386
    %v388 = vsel %vm366, %v387, %v383
    %v389 = vlaneseq
    %v390 = vshrl.u32 %v389, 7
    %v391 = vsub.s32 %v368, %v390
    %v392 = vrot.slane %v307, %v391
    %v393 = vsel %vm373, %v392, %v388
    %v394 = vlaneseq
    %v395 = vshrl.u32 %v394, 7
    %v396 = vsub.s32 %v349, %v395
    %v397 = vrot.slane %v310, %v396
    %v398 = vlaneseq
    %v399 = vshrl.u32 %v398, 7
    %v400 = vsub.s32 %v354, %v399
    %v401 = vrot.slane %v313, %v400
    %v402 = vsel %vm359, %v401, %v397
    %v403 = vlaneseq
    %v404 = vshrl.u32 %v403, 7
    %v405 = vsub.s32 %v361, %v404
    %v406 = vrot.slane %v316, %v405
    %v407 = vsel %vm366, %v406, %v402
    %v408 = vlaneseq
    %v409 = vshrl.u32 %v408, 7
    %v410 = vsub.s32 %v368, %v409
    %v411 = vrot.slane %v319, %v410
    %v412 = vsel %vm373, %v411, %v407
    %v413 = vlaneseq
    %v414 = vshrl.u32 %v413, 7
    %v415 = vsub.s32 %v349, %v414
    %v416 = vrot.slane %v322, %v415
    %v417 = vlaneseq
    %v418 = vshrl.u32 %v417, 7
    %v419 = vsub.s32 %v354, %v418
    %v420 = vrot.slane %v325, %v419
    %v421 = vsel %vm359, %v420, %v416
    %v422 = vlaneseq
    %v423 = vshrl.u32 %v422, 7
    %v424 = vsub.s32 %v361, %v423
    %v425 = vrot.slane %v328, %v424
    %v426 = vsel %vm366, %v425, %v421
    %v427 = vlaneseq
    %v428 = vshrl.u32 %v427, 7
    %v429 = vsub.s32 %v368, %v428
    %v430 = vrot.slane %v331, %v429
    %v431 = vsel %vm373, %v430, %v426
    %vm432 = vcmask 1041409
    %v433 = vsel %vm432, %v393, %v374
    %vm434 = vcmask 1042434
    %v435 = vsel %vm434, %v412, %v433
    %vm436 = vcmask 1043459
    %v437 = vsel %vm436, %v431, %v435
    %vm439 = vcmask 257024
    %v440 = vsel %vm439, %v437, 0.0
    %441 = vadd.xlane.f32.xlu0 %v440
    %v442 = vpop.xlane.xlu0 %441
    %v444 = vlaneseq
    %v445 = vshrl.u32 %v444, 7
    %v446 = vsub.s32 0, %v445
    %v447 = vrot.slane %v69, %v446
    %449 = vbcast.lane.b32.xlu0 %v447, 256
    %v450 = vpop.permute.xlu0 %449
    %v452 = vadd.f32 %v442, %v450
    %454 = vset.pattern.permute.xlu0 0
    %455 = vperm.xlu0 %454, %v452
    %v456 = vpop.permute.xlu0 %455
    %v457 = vlaneseq
    %v458 = vshrl.u32 %v457, 7
    %v459 = vsub.s32 %v349, %v458
    %v460 = vrot.slane %v456, %v459
    %vm462 = vcmask 24576
    %463 = vst.msk [vmem:[#allocation2] sm:$0x1] %vm462, %v460
    %s464 = scalar_lea.vmem %s0, 64
    %v465 = vld [vmem:[%s464] sm:$0xf]
    %v466 = vld [vmem:[%s464 + $0x4] sm:$0xf]
    %v467 = vld [vmem:[%s464 + $0x8] sm:$0xf]
    %v468 = vld [vmem:[%s464 + $0xc] sm:$0xf]
    %v469 = vld [vmem:[%s464 + $0x10] sm:$0xf]
    %v470 = vld [vmem:[%s464 + $0x14] sm:$0xf]
    %v471 = vld [vmem:[%s464 + $0x18] sm:$0xf]
    %v472 = vld [vmem:[%s464 + $0x1c] sm:$0xf]
    %v473 = vld [vmem:[%s464 + $0x20] sm:$0xf]
    %v474 = vld [vmem:[%s464 + $0x24] sm:$0xf]
    %v475 = vld [vmem:[%s464 + $0x28] sm:$0xf]
    %v476 = vld [vmem:[%s464 + $0x2c] sm:$0xf]
    %v477 = vld [vmem:[%s464 + $0x30] sm:$0xf]
    %v478 = vld [vmem:[%s464 + $0x34] sm:$0xf]
    %v479 = vld [vmem:[%s464 + $0x38] sm:$0xf]
    %v480 = vld [vmem:[%s464 + $0x3c] sm:$0xf]
    %v497 = vunpack.c.l.b16 %v465
    %v498 = vunpack.c.l.b16 %v466
    %v499 = vunpack.c.l.b16 %v467
    %v500 = vunpack.c.l.b16 %v468
    %v501 = vunpack.c.l.b16 %v469
    %v502 = vunpack.c.l.b16 %v470
    %v503 = vunpack.c.l.b16 %v471
    %v504 = vunpack.c.l.b16 %v472
    %v505 = vunpack.c.l.b16 %v473
    %v506 = vunpack.c.l.b16 %v474
    %v507 = vunpack.c.l.b16 %v475
    %v508 = vunpack.c.l.b16 %v476
    %v509 = vunpack.c.l.b16 %v477
    %v510 = vunpack.c.l.b16 %v478
    %v511 = vunpack.c.l.b16 %v479
    %v512 = vunpack.c.l.b16 %v480
    %v513 = vpack.c.b16 %v498, %v497
    %v514 = vpack.c.b16 %v500, %v499
    %v515 = vpack.c.b16 %v502, %v501
    %v516 = vpack.c.b16 %v504, %v503
    %v517 = vpack.c.b16 %v506, %v505
    %v518 = vpack.c.b16 %v508, %v507
    %v519 = vpack.c.b16 %v510, %v509
    %v520 = vpack.c.b16 %v512, %v511
    %529 = vmatprep.subr.bf16.mxu0 0
    %530 = vmatpush1.bf16.msra.mxu0 %v520
    %531 = vmatprep.subr.bf16.mxu0 0
    %532 = vmatpush1.bf16.msra.mxu0 %v519
    %533 = vmatprep.subr.bf16.mxu0 0
    %534 = vmatpush1.bf16.msra.mxu0 %v518
    %535 = vmatprep.subr.bf16.mxu0 0
    %536 = vmatpush1.bf16.msra.mxu0 %v517
    %537 = vmatprep.subr.bf16.mxu0 0
    %538 = vmatpush1.bf16.msra.mxu0 %v516
    %539 = vmatprep.subr.bf16.mxu0 0
    %540 = vmatpush1.bf16.msra.mxu0 %v515
    %541 = vmatprep.subr.bf16.mxu0 0
    %542 = vmatpush1.bf16.msra.mxu0 %v514
    %543 = vmatprep.subr.bf16.mxu0 0
    %544 = vmatpush1.bf16.msra.mxu0 %v513
    %545 = vmatprep.subr.bf16.mxu0 0
    %546 = vmatpush2.bf16.msra.mxu0 0
    %547 = vmatprep.subr.bf16.mxu0 0
    %548 = vmatpush2.bf16.msra.mxu0 0
    %549 = vmatprep.subr.bf16.mxu0 0
    %550 = vmatpush2.bf16.msra.mxu0 0
    %551 = vmatprep.subr.bf16.mxu0 0
    %552 = vmatpush2.bf16.msra.mxu0 0
    %553 = vmatprep.subr.bf16.mxu0 0
    %554 = vmatpush2.bf16.msra.mxu0 0
    %555 = vmatprep.subr.bf16.mxu0 0
    %556 = vmatpush2.bf16.msra.mxu0 0
    %557 = vmatprep.subr.bf16.mxu0 0
    %558 = vmatpush2.bf16.msra.mxu0 0
    %559 = vmatprep.subr.bf16.mxu0 0
    %560 = vmatpush2.bf16.msra.mxu0 0
    %561 = vmatprep.mubr.bf16.mxu0 0
    %562 = vmatmul.mubr.bf16.gmra.mxu0 %v94
    %v563 = vpop.f32.mrf.mxu0
    %v564 = vadd.f32 0.0, %v563
    %v565 = vpop.f32.mrf.mxu0
    %v566 = vpop.f32.mrf.mxu0
    %v567 = vadd.f32 0.0, %v566
    %v568 = vpop.f32.mrf.mxu0
    %569 = vmatprep.mubr.bf16.mxu0 0
    %570 = vmatmul.mubr.bf16.gmra.mxu0 %v95
    %v571 = vpop.f32.mrf.mxu0
    %v572 = vadd.f32 0.0, %v571
    %v573 = vpop.f32.mrf.mxu0
    %v574 = vpop.f32.mrf.mxu0
    %v575 = vadd.f32 0.0, %v574
    %v576 = vpop.f32.mrf.mxu0
    %577 = vdwg.mxu0
    %vm578 = vcmp.gt.f32.partialorder %v564, 0.0
    %vm579 = vcmp.gt.f32.partialorder %v567, 0.0
    %vm580 = vcmp.gt.f32.partialorder %v572, 0.0
    %vm581 = vcmp.gt.f32.partialorder %v575, 0.0
    %v582 = vmin.f32 %v564, 0.0
    %v583 = vmin.f32 %v567, 0.0
    %v584 = vmin.f32 %v572, 0.0
    %v585 = vmin.f32 %v575, 0.0
    %v586 = vmul.f32 %v582, 1.442695
    %v587 = vpow.pop %v586
    %v588 = vmul.f32 %v583, 1.442695
    %v589 = vpow.pop %v588
    %v590 = vmul.f32 %v584, 1.442695
    %v591 = vpow.pop %v590
    %v592 = vmul.f32 %v585, 1.442695
    %v593 = vpow.pop %v592
    %v594 = vsub.f32 %v587, 1.0
    %v595 = vsub.f32 %v589, 1.0
    %v596 = vsub.f32 %v591, 1.0
    %v597 = vsub.f32 %v593, 1.0
    %v598 = vsel %vm578, %v564, %v594
    %v599 = vsel %vm579, %v567, %v595
    %v600 = vsel %vm580, %v572, %v596
    %v601 = vsel %vm581, %v575, %v597
    %v602 = vmul.f32 %v598, %v222
    %v603 = vmul.f32 %v599, %v227
    %v604 = vmul.f32 %v600, %v232
    %v605 = vmul.f32 %v601, %v237
    %v606 = vadd.f32 %v602, %v246
    %v607 = vadd.f32 %v603, %v251
    %v608 = vadd.f32 %v604, %v256
    %v609 = vadd.f32 %v605, %v261
    %v610 = vmul.f32 %v53, %v606
    %v611 = vmul.f32 %v54, %v607
    %v612 = vmul.f32 %v55, %v608
    %v613 = vmul.f32 %v56, %v609
    %v614 = vmul.f32 %v57, %v606
    %v615 = vmul.f32 %v58, %v607
    %v616 = vmul.f32 %v59, %v608
    %v617 = vmul.f32 %v60, %v609
    %v618 = vmul.f32 %v61, %v606
    %v619 = vmul.f32 %v62, %v607
    %v620 = vmul.f32 %v63, %v608
    %v621 = vmul.f32 %v64, %v609
    %v622 = vmul.f32 %v65, %v606
    %v623 = vmul.f32 %v66, %v607
    %v624 = vmul.f32 %v67, %v608
    %v625 = vmul.f32 %v68, %v609
    %v626 = vsel %vm283, %v610, 0.0
    %627 = vadd.xlane.f32.xlu0 %v626
    %v628 = vpop.xlane.xlu0 %627
    %v629 = vsel %vm283, %v611, 0.0
    %630 = vadd.xlane.f32.xlu0 %v629
    %v631 = vpop.xlane.xlu0 %630
    %v632 = vsel %vm283, %v612, 0.0
    %633 = vadd.xlane.f32.xlu0 %v632
    %v634 = vpop.xlane.xlu0 %633
    %v635 = vsel %vm283, %v613, 0.0
    %636 = vadd.xlane.f32.xlu0 %v635
    %v637 = vpop.xlane.xlu0 %636
    %v638 = vsel %vm283, %v614, 0.0
    %639 = vadd.xlane.f32.xlu0 %v638
    %v640 = vpop.xlane.xlu0 %639
    %v641 = vsel %vm283, %v615, 0.0
    %642 = vadd.xlane.f32.xlu0 %v641
    %v643 = vpop.xlane.xlu0 %642
    %v644 = vsel %vm283, %v616, 0.0
    %645 = vadd.xlane.f32.xlu0 %v644
    %v646 = vpop.xlane.xlu0 %645
    %v647 = vsel %vm283, %v617, 0.0
    %648 = vadd.xlane.f32.xlu0 %v647
    %v649 = vpop.xlane.xlu0 %648
    %v650 = vsel %vm283, %v618, 0.0
    %651 = vadd.xlane.f32.xlu0 %v650
    %v652 = vpop.xlane.xlu0 %651
    %v653 = vsel %vm283, %v619, 0.0
    %654 = vadd.xlane.f32.xlu0 %v653
    %v655 = vpop.xlane.xlu0 %654
    %v656 = vsel %vm283, %v620, 0.0
    %657 = vadd.xlane.f32.xlu0 %v656
    %v658 = vpop.xlane.xlu0 %657
    %v659 = vsel %vm283, %v621, 0.0
    %660 = vadd.xlane.f32.xlu0 %v659
    %v661 = vpop.xlane.xlu0 %660
    %v662 = vsel %vm283, %v622, 0.0
    %663 = vadd.xlane.f32.xlu0 %v662
    %v664 = vpop.xlane.xlu0 %663
    %v665 = vsel %vm283, %v623, 0.0
    %666 = vadd.xlane.f32.xlu0 %v665
    %v667 = vpop.xlane.xlu0 %666
    %v668 = vsel %vm283, %v624, 0.0
    %669 = vadd.xlane.f32.xlu0 %v668
    %v670 = vpop.xlane.xlu0 %669
    %v671 = vsel %vm283, %v625, 0.0
    %672 = vadd.xlane.f32.xlu0 %v671
    %v673 = vpop.xlane.xlu0 %672
    %v690 = vlaneseq
    %v691 = vshrl.u32 %v690, 7
    %v692 = vsub.s32 %v349, %v691
    %v693 = vrot.slane %v628, %v692
    %v694 = vlaneseq
    %v695 = vshrl.u32 %v694, 7
    %v696 = vsub.s32 %v354, %v695
    %v697 = vrot.slane %v631, %v696
    %v698 = vsel %vm359, %v697, %v693
    %v699 = vlaneseq
    %v700 = vshrl.u32 %v699, 7
    %v701 = vsub.s32 %v361, %v700
    %v702 = vrot.slane %v634, %v701
    %v703 = vsel %vm366, %v702, %v698
    %v704 = vlaneseq
    %v705 = vshrl.u32 %v704, 7
    %v706 = vsub.s32 %v368, %v705
    %v707 = vrot.slane %v637, %v706
    %v708 = vsel %vm373, %v707, %v703
    %v709 = vlaneseq
    %v710 = vshrl.u32 %v709, 7
    %v711 = vsub.s32 %v349, %v710
    %v712 = vrot.slane %v640, %v711
    %v713 = vlaneseq
    %v714 = vshrl.u32 %v713, 7
    %v715 = vsub.s32 %v354, %v714
    %v716 = vrot.slane %v643, %v715
    %v717 = vsel %vm359, %v716, %v712
    %v718 = vlaneseq
    %v719 = vshrl.u32 %v718, 7
    %v720 = vsub.s32 %v361, %v719
    %v721 = vrot.slane %v646, %v720
    %v722 = vsel %vm366, %v721, %v717
    %v723 = vlaneseq
    %v724 = vshrl.u32 %v723, 7
    %v725 = vsub.s32 %v368, %v724
    %v726 = vrot.slane %v649, %v725
    %v727 = vsel %vm373, %v726, %v722
    %v728 = vlaneseq
    %v729 = vshrl.u32 %v728, 7
    %v730 = vsub.s32 %v349, %v729
    %v731 = vrot.slane %v652, %v730
    %v732 = vlaneseq
    %v733 = vshrl.u32 %v732, 7
    %v734 = vsub.s32 %v354, %v733
    %v735 = vrot.slane %v655, %v734
    %v736 = vsel %vm359, %v735, %v731
    %v737 = vlaneseq
    %v738 = vshrl.u32 %v737, 7
    %v739 = vsub.s32 %v361, %v738
    %v740 = vrot.slane %v658, %v739
    %v741 = vsel %vm366, %v740, %v736
    %v742 = vlaneseq
    %v743 = vshrl.u32 %v742, 7
    %v744 = vsub.s32 %v368, %v743
    %v745 = vrot.slane %v661, %v744
    %v746 = vsel %vm373, %v745, %v741
    %v747 = vlaneseq
    %v748 = vshrl.u32 %v747, 7
    %v749 = vsub.s32 %v349, %v748
    %v750 = vrot.slane %v664, %v749
    %v751 = vlaneseq
    %v752 = vshrl.u32 %v751, 7
    %v753 = vsub.s32 %v354, %v752
    %v754 = vrot.slane %v667, %v753
    %v755 = vsel %vm359, %v754, %v750
    %v756 = vlaneseq
    %v757 = vshrl.u32 %v756, 7
    %v758 = vsub.s32 %v361, %v757
    %v759 = vrot.slane %v670, %v758
    %v760 = vsel %vm366, %v759, %v755
    %v761 = vlaneseq
    %v762 = vshrl.u32 %v761, 7
    %v763 = vsub.s32 %v368, %v762
    %v764 = vrot.slane %v673, %v763
    %v765 = vsel %vm373, %v764, %v760
    %v766 = vsel %vm432, %v727, %v708
    %v767 = vsel %vm434, %v746, %v766
    %v768 = vsel %vm436, %v765, %v767
    %v770 = vsel %vm439, %v768, 0.0
    %771 = vadd.xlane.f32.xlu0 %v770
    %v772 = vpop.xlane.xlu0 %771
    %v773 = vadd.f32 %v772, %v450
    %775 = vset.pattern.permute.xlu0 0
    %776 = vperm.xlu0 %775, %v773
    %v777 = vpop.permute.xlu0 %776
    %v778 = vlaneseq
    %v779 = vshrl.u32 %v778, 7
    %v780 = vsub.s32 %v349, %v779
    %v781 = vrot.slane %v777, %v780
    %s783 = scalar_lea.vmem [#allocation2], 1
    %784 = vst.msk [vmem:[%s783] sm:$0x1] %vm462, %v781
    // Predicated region
    $region26: #{tpu_custom_call.1} parent=1 // pred_check
      _
    $region27: #{tpu_custom_call.1} parent=1 // pred_check_branch
      %786 = sbr.rel (0) target = $region29
    $region28: #{tpu_custom_call.1} parent=1 // pred_region
      %s788 = ssub.s32 32, 32
      %789 = vsyncadd [#allocation3], %s788
      %s790 = sshll.u32 [#allocation2], 4
      %s791 = int_to_ptr.vmem [resolvable:$true] %s790
      %796 = dma.vmem_to_hbm [thread:$0]  %s791, 32, %s6, [#allocation3], 16, 16, 1
    $region29: #{tpu_custom_call.1} parent=1 // pred_fallthru
      _
    // Predicated region
    $region30: #{tpu_custom_call.1} parent=1 // pred_check
      _
    $region31: #{tpu_custom_call.1} parent=1 // pred_check_branch
      %798 = sbr.rel (0) target = $region33
    $region32: #{tpu_custom_call.1} parent=1 // pred_region
      %799 = dma.done [#allocation3], 32
    $region33: #{tpu_custom_call.1} parent=1 // pred_fallthru
      _
    %800 = vsyncpa [#allocation3], 1

</llo_original>
